<compile_context>
chip_gen: v6e
topology: v6e:2x2x1
jax: 0.10.0
libtpu: 0.0.40
codegen_flags: <defaults>
</compile_context>

<pallas_src>
import functools

import jax
import jax.numpy as jnp
from jax.experimental import pallas as pl
from jax.experimental.pallas import tpu as pltpu

BN_EPS = 1e-5


def _round_up(a, b):
    return (a + b - 1) // b * b


def _vmem_limit_bytes():
    """Scoped VMEM budget: ~half of physical, capped at 64 MiB.

    128 MiB phys (v5e/v6e) -> 64 MiB limit; 64 MiB phys (v7x, per TC) -> 32 MiB.
    Falls back to the v7x-safe 32 MiB if the query is unavailable.
    """
    phys = 64 * 1024 * 1024
    try:
        phys = int(getattr(pltpu.get_tpu_info(), "vmem_capacity_bytes", phys))
    except Exception:
        pass
    return max(16 * 1024 * 1024, min(phys // 2, 64 * 1024 * 1024))


# ----------------------------- kernels ------------------------------------ #

def _conv_stats_y_kernel(p_ref, w_ref, y_ref, sum_ref, sq_ref):
    """Pass 1 (store-y): MXU conv tile, write y (bf16) + per-tile BN partials.

    p_ref: (K, tm) bf16    w_ref: (Cout, K) bf16 resident
    y_ref: (Cout, tm) bf16 sum_ref/sq_ref: (Cout, 1) f32 per-tile partials
    """
    y = jnp.dot(w_ref[...], p_ref[...], preferred_element_type=jnp.float32)
    y_ref[...] = y.astype(y_ref.dtype)
    sum_ref[...] = jnp.sum(y, axis=1, keepdims=True)
    sq_ref[...] = jnp.sum(y * y, axis=1, keepdims=True)


def _conv_stats_kernel(p_ref, w_ref, sum_ref, sq_ref):
    """Pass 1 (recompute): MXU conv tile, emit only per-tile BN partial sums."""
    y = jnp.dot(w_ref[...], p_ref[...], preferred_element_type=jnp.float32)
    sum_ref[...] = jnp.sum(y, axis=1, keepdims=True)
    sq_ref[...] = jnp.sum(y * y, axis=1, keepdims=True)


def _bn_relu_kernel(y_ref, scale_ref, shift_ref, o_ref):
    """Pass 2 (store-y): pure VPU affine BN + ReLU on the stored conv output."""
    y = y_ref[...].astype(jnp.float32)
    o_ref[...] = jnp.maximum(y * scale_ref[...] + shift_ref[...], 0.0).astype(o_ref.dtype)


def _conv_bn_relu_kernel(p_ref, w_ref, scale_ref, shift_ref, o_ref):
    """Pass 2 (recompute): conv tile + folded BN (y*scale + shift) + ReLU."""
    y = jnp.dot(w_ref[...], p_ref[...], preferred_element_type=jnp.float32)
    o_ref[...] = jnp.maximum(y * scale_ref[...] + shift_ref[...], 0.0).astype(o_ref.dtype)


# ----------------------------- wrapper ------------------------------------ #

def conv_block_forward(x_nchw, weight_oihw, gamma, beta, *,
                       stride=2, padding=1, dilation=1,
                       tm_target=32768, out_dtype=jnp.bfloat16,
                       y_roundtrip=None):
    """ConvBlock forward.  x_nchw: (N, Cin, H, W) -> (N, Cout, Ho, Wo) out_dtype."""
    assert dilation == 1, "this kernel implements dilation=1, groups=1"
    N, Cin, H, W = x_nchw.shape
    Cout, Cin_w, KH, KW = weight_oihw.shape
    assert Cin_w == Cin
    S, P = stride, padding
    Ho = (H + 2 * P - (KH - 1) - 1) // S + 1
    Wo = (W + 2 * P - (KW - 1) - 1) // S + 1
    HW = Ho * Wo
    M = N * HW                      # true element count for BN statistics
    K = KH * KW * Cin

    out_b = jnp.dtype(out_dtype).itemsize
    if y_roundtrip is None:
        # y round-trip (2*Cout*2 B/col) vs a second patch read (K*2 B/col).
        y_roundtrip = 2 * Cout <= K

    # ---- tile sizing: biggest lane tile that fits the double-buffered VMEM budget.
    vmem_limit = _vmem_limit_bytes()
    budget = (vmem_limit * 3) // 4                      # headroom for compiler scratch
    resident = Cout * K * 2 + 8 * Cout * 4              # weights + scale/shift
    per_col = 2 * (2 * K + 2 * Cout + out_b * Cout)     # 2 buffers x (patch + y + out)
    tm_vmem = max(128, (budget - resident) // per_col)
    hw_r = _round_up(HW, 128)
    tm = max(128, (min(tm_target, tm_vmem, hw_r) // 128) * 128)
    if N == 1 and tm >= hw_r and hw_r >= 256:
        tm = _round_up(hw_r // 2, 128)                  # keep >=2 steps for megacore
    HW_pad = _round_up(HW, tm)
    n_hw = HW_pad // tm

    # ---- glue (plain JAX, all bf16): zero-pad + strided im2col, (N, K, Ho*Wo)
    #      with HW lane-dense.  Padded lane columns are exactly zero so they
    #      contribute nothing to the BN sums (we divide by the true M below).
    x_b = x_nchw.astype(jnp.bfloat16)
    x_p = jnp.pad(x_b, ((0, 0), (0, 0), (P, P), (P, P)))
    taps = [x_p[:, :, kh:kh + S * Ho:S, kw:kw + S * Wo:S]
            for kh in range(KH) for kw in range(KW)]
    patches = jnp.stack(taps, axis=1).reshape(N, K, HW)          # K order = (kh, kw, cin)
    if HW_pad != HW:
        patches = jnp.pad(patches, ((0, 0), (0, 0), (0, HW_pad - HW)))
    # conv weight (Cout, Cin, KH, KW) -> (Cout, KH, KW, Cin) -> (Cout, K), bf16
    w2d = jnp.transpose(weight_oihw, (0, 2, 3, 1)).reshape(Cout, K).astype(jnp.bfloat16)

    grid = (N, n_hw)
    patch_spec = pl.BlockSpec((None, K, tm), lambda n, i: (n, 0, i))
    w_spec = pl.BlockSpec((Cout, K), lambda n, i: (0, 0))          # resident weights
    col_spec = pl.BlockSpec((Cout, 1), lambda n, i: (0, 0))        # resident per-channel
    ytile_spec = pl.BlockSpec((None, Cout, tm), lambda n, i: (n, 0, i))
    part_spec = pl.BlockSpec((None, Cout, 1), lambda n, i: (n * n_hw + i, 0, 0))

    cparams = pltpu.CompilerParams(dimension_semantics=("parallel", "parallel"),
                                   vmem_limit_bytes=vmem_limit)
    flops = 2 * N * HW_pad * K * Cout
    patch_bytes = N * K * HW_pad * 2
    w_bytes = Cout * K * 2
    y_bytes = N * Cout * HW_pad * 2
    out_bytes_tot = N * Cout * HW_pad * out_b
    part_bytes = 2 * N * n_hw * Cout * 4

    # ---- pass 1: conv + exact batch statistics as per-tile partial sums
    #      (fully parallel grid; reduced in XLA -> both v7x TensorCores usable).
    if y_roundtrip:
        y_bf, psum, psq = pl.pallas_call(
            _conv_stats_y_kernel,
            out_shape=(jax.ShapeDtypeStruct((N, Cout, HW_pad), jnp.bfloat16),
                       jax.ShapeDtypeStruct((N * n_hw, Cout, 1), jnp.float32),
                       jax.ShapeDtypeStruct((N * n_hw, Cout, 1), jnp.float32)),
            grid_spec=pltpu.PrefetchScalarGridSpec(
                num_scalar_prefetch=0, grid=grid,
                in_specs=[patch_spec, w_spec],
                out_specs=(ytile_spec, part_spec, part_spec)),
            compiler_params=cparams,
            cost_estimate=pl.CostEstimate(
                flops=flops, transcendentals=0,
                bytes_accessed=patch_bytes + w_bytes + y_bytes + part_bytes),
        )(patches, w2d)
    else:
        psum, psq = pl.pallas_call(
            _conv_stats_kernel,
            out_shape=(jax.ShapeDtypeStruct((N * n_hw, Cout, 1), jnp.float32),
                       jax.ShapeDtypeStruct((N * n_hw, Cout, 1), jnp.float32)),
            grid_spec=pltpu.PrefetchScalarGridSpec(
                num_scalar_prefetch=0, grid=grid,
                in_specs=[patch_spec, w_spec],
                out_specs=(part_spec, part_spec)),
            compiler_params=cparams,
            cost_estimate=pl.CostEstimate(
                flops=flops, transcendentals=0,
                bytes_accessed=patch_bytes + w_bytes + part_bytes),
        )(patches, w2d)

    # Fold exact training-mode BN (biased variance, eps) + gamma/beta into a
    # per-channel scale/shift.  Tiny (Cout, 1) f32 XLA ops; variance clamped.
    m_f = jnp.float32(M)
    mean = jnp.sum(psum, axis=0) / m_f
    var = jnp.maximum(jnp.sum(psq, axis=0) / m_f - mean * mean, 0.0)
    inv_std = jax.lax.rsqrt(var + BN_EPS)
    scale = gamma.reshape(Cout, 1).astype(jnp.float32) * inv_std
    shift = beta.reshape(Cout, 1).astype(jnp.float32) - mean * scale
    # TODO(synk): PyTorch BatchNorm2d in training mode also updates
    # running_mean / running_var (unbiased); this kernel only returns the output.

    # ---- pass 2: BN affine + ReLU, written directly in NCHW layout (no transpose).
    if y_roundtrip:
        out3 = pl.pallas_call(
            _bn_relu_kernel,
            out_shape=jax.ShapeDtypeStruct((N, Cout, HW_pad), out_dtype),
            grid_spec=pltpu.PrefetchScalarGridSpec(
                num_scalar_prefetch=0, grid=grid,
                in_specs=[ytile_spec, col_spec, col_spec],
                out_specs=ytile_spec),
            compiler_params=cparams,
            cost_estimate=pl.CostEstimate(
                flops=3 * N * HW_pad * Cout, transcendentals=0,
                bytes_accessed=y_bytes + out_bytes_tot + 2 * Cout * 4),
        )(y_bf, scale, shift)
    else:
        out3 = pl.pallas_call(
            _conv_bn_relu_kernel,
            out_shape=jax.ShapeDtypeStruct((N, Cout, HW_pad), out_dtype),
            grid_spec=pltpu.PrefetchScalarGridSpec(
                num_scalar_prefetch=0, grid=grid,
                in_specs=[patch_spec, w_spec, col_spec, col_spec],
                out_specs=ytile_spec),
            compiler_params=cparams,
            cost_estimate=pl.CostEstimate(
                flops=flops, transcendentals=0,
                bytes_accessed=patch_bytes + w_bytes + out_bytes_tot + 2 * Cout * 4),
        )(patches, w2d, scale, shift)

    # ---- glue: drop lane padding; layout is already (N, Cout, Ho, Wo).
    return out3[:, :, :HW].reshape(N, Cout, Ho, Wo)


def _reference_forward(x_nchw, weight_oihw, gamma, beta, *, stride=2, padding=1):
    """Pure-JAX reference (lax conv + training-mode BN + ReLU)."""
    y = jax.lax.conv_general_dilated(
        x_nchw.astype(jnp.float32), weight_oihw.astype(jnp.float32),
        window_strides=(stride, stride),
        padding=((padding, padding), (padding, padding)),
        dimension_numbers=("NCHW", "OIHW", "NCHW"))
    mean = jnp.mean(y, axis=(0, 2, 3), keepdims=True)
    var = jnp.mean((y - mean) ** 2, axis=(0, 2, 3), keepdims=True)
    yn = (y - mean) * jax.lax.rsqrt(var + BN_EPS)
    yn = yn * gamma.reshape(1, -1, 1, 1) + beta.reshape(1, -1, 1, 1)
    return jnp.maximum(yn, 0.0)


if __name__ == "__main__":
    # ConvBlock(in=4, out=8, k=3, s=2, p=1) at small shapes.
    N, Cin, H, W = 2, 4, 16, 16
    Cout, KH, KW = 8, 3, 3

    key = jax.random.PRNGKey(0)
    kx, kw_, kg, kb = jax.random.split(key, 4)
    x = jax.random.normal(kx, (N, Cin, H, W), dtype=jnp.float32)
    weight = jax.random.normal(kw_, (Cout, Cin, KH, KW), dtype=jnp.float32) * 0.1
    gamma = 1.0 + 0.1 * jax.random.normal(kg, (Cout,), dtype=jnp.float32)
    beta = 0.1 * jax.random.normal(kb, (Cout,), dtype=jnp.float32)

    # Reference on bf16-rounded inputs (kernel intentionally feeds the MXU bf16
    # operands, keeps bf16 intermediates/outputs, with f32 accumulation & BN math).
    x_q = x.astype(jnp.bfloat16).astype(jnp.float32)
    w_q = weight.astype(jnp.bfloat16).astype(jnp.float32)
    ref = _reference_forward(x_q, w_q, gamma, beta)

    # Default path (store-y: 2*Cout < K here).
    fwd = jax.jit(conv_block_forward)
    out = jax.block_until_ready(fwd(x, weight, gamma, beta))
    assert out.shape == (N, Cout, 8, 8), out.shape
    assert jnp.allclose(out.astype(jnp.float32), ref, rtol=2e-2, atol=2e-2), float(
        jnp.max(jnp.abs(out.astype(jnp.float32) - ref)))

    # Recompute path (used by blocks with Cout >= K/2) — also exercised once.
    fwd_rc = jax.jit(functools.partial(conv_block_forward, y_roundtrip=False))
    out_rc = jax.block_until_ready(fwd_rc(x, weight, gamma, beta))
    assert jnp.allclose(out_rc.astype(jnp.float32), ref, rtol=2e-2, atol=2e-2), float(
        jnp.max(jnp.abs(out_rc.astype(jnp.float32) - ref)))

    print("KERNEL_OK")
</pallas_src>

<mosaic_0001>
module attributes {stable_mosaic.version = 11 : i64} {
  func.func @_conv_stats_y_kernel(%arg0: i32, %arg1: i32, %arg2: memref<1x36x128xbf16, #tpu.memory_space<vmem>>, %arg3: memref<8x36xbf16, #tpu.memory_space<vmem>>, %arg4: memref<1x8x128xbf16, #tpu.memory_space<vmem>>, %arg5: memref<1x8x1xf32, #tpu.memory_space<vmem>>, %arg6: memref<1x8x1xf32, #tpu.memory_space<vmem>>) attributes {dimension_semantics = [#tpu.dimension_semantics<parallel>, #tpu.dimension_semantics<parallel>], iteration_bounds = array<i64: 2, 1>, scalar_prefetch = 0 : i64, scratch_operands = 0 : i64, tpu.core_type = #tpu.core_type<tc>, window_params = [{transform_indices = @transform_0, window_bounds = array<i64: 1, 36, 128>}, {pipeline_mode = #tpu.pipeline_mode<synchronous>, transform_indices = @transform_1, window_bounds = array<i64: 8, 36>}, {transform_indices = @transform_2, window_bounds = array<i64: 1, 8, 128>}, {transform_indices = @transform_3, window_bounds = array<i64: 1, 8, 1>}, {transform_indices = @transform_4, window_bounds = array<i64: 1, 8, 1>}]} {
    %c0 = arith.constant 0 : index
    %c0_0 = arith.constant 0 : index
    %0 = vector.load %arg3[%c0, %c0_0] : memref<8x36xbf16, #tpu.memory_space<vmem>>, vector<8x36xbf16>
    %c0_1 = arith.constant 0 : index
    %c0_2 = arith.constant 0 : index
    %c0_3 = arith.constant 0 : index
    %1 = vector.load %arg2[%c0_1, %c0_2, %c0_3] : memref<1x36x128xbf16, #tpu.memory_space<vmem>>, vector<1x36x128xbf16>
    %2 = vector.shape_cast %1 : vector<1x36x128xbf16> to vector<36x128xbf16>
    %cst = arith.constant dense<0.000000e+00> : vector<8x128xf32>
    %3 = tpu.matmul %0, %2, %cst {dimension_numbers = #tpu.dot_dimension_numbers<[1], [0], [0], [1], [0, 0, 1, 1], [], []>} : vector<8x36xbf16>, vector<36x128xbf16>, vector<8x128xf32> -> vector<8x128xf32>
    %4 = arith.truncf %3 : vector<8x128xf32> to vector<8x128xbf16>
    %c0_4 = arith.constant 0 : index
    %c0_5 = arith.constant 0 : index
    %c0_6 = arith.constant 0 : index
    %5 = vector.load %arg4[%c0_4, %c0_5, %c0_6] : memref<1x8x128xbf16, #tpu.memory_space<vmem>>, vector<1x8x128xbf16>
    %6 = vector.shape_cast %5 : vector<1x8x128xbf16> to vector<8x128xbf16>
    %7 = vector.shape_cast %4 : vector<8x128xbf16> to vector<1x8x128xbf16>
    tpu.vector_store %arg4[%c0_4, %c0_5, %c0_6], %7 {strides = array<i32>} : memref<1x8x128xbf16, #tpu.memory_space<vmem>>, vector<1x8x128xbf16>,
    %cst_7 = arith.constant dense<0.000000e+00> : vector<8xf32>
    %8 = vector.multi_reduction <add>, %3, %cst_7 [1] : vector<8x128xf32> to vector<8xf32>
    %9 = vector.shape_cast %8 : vector<8xf32> to vector<8x1xf32>
    %c0_8 = arith.constant 0 : index
    %c0_9 = arith.constant 0 : index
    %c0_10 = arith.constant 0 : index
    %10 = vector.load %arg5[%c0_8, %c0_9, %c0_10] : memref<1x8x1xf32, #tpu.memory_space<vmem>>, vector<1x8x1xf32>
    %11 = vector.shape_cast %10 : vector<1x8x1xf32> to vector<8x1xf32>
    %12 = vector.shape_cast %9 : vector<8x1xf32> to vector<1x8x1xf32>
    tpu.vector_store %arg5[%c0_8, %c0_9, %c0_10], %12 {strides = array<i32>} : memref<1x8x1xf32, #tpu.memory_space<vmem>>, vector<1x8x1xf32>,
    %13 = arith.mulf %3, %3 : vector<8x128xf32>
    %cst_11 = arith.constant dense<0.000000e+00> : vector<8xf32>
    %14 = vector.multi_reduction <add>, %13, %cst_11 [1] : vector<8x128xf32> to vector<8xf32>
    %15 = vector.shape_cast %14 : vector<8xf32> to vector<8x1xf32>
    %c0_12 = arith.constant 0 : index
    %c0_13 = arith.constant 0 : index
    %c0_14 = arith.constant 0 : index
    %16 = vector.load %arg6[%c0_12, %c0_13, %c0_14] : memref<1x8x1xf32, #tpu.memory_space<vmem>>, vector<1x8x1xf32>
    %17 = vector.shape_cast %16 : vector<1x8x1xf32> to vector<8x1xf32>
    %18 = vector.shape_cast %15 : vector<8x1xf32> to vector<1x8x1xf32>
    tpu.vector_store %arg6[%c0_12, %c0_13, %c0_14], %18 {strides = array<i32>} : memref<1x8x1xf32, #tpu.memory_space<vmem>>, vector<1x8x1xf32>,
    return
  }
  func.func @transform_0(%arg0: i32, %arg1: i32) -> (i32, i32, i32) {
    %c0_i32 = arith.constant 0 : i32
    %c0_i32_0 = arith.constant 0 : i32
    return %arg0, %c0_i32, %arg1 : i32, i32, i32
  }
  func.func @transform_1(%arg0: i32, %arg1: i32) -> (i32, i32) {
    %c0_i32 = arith.constant 0 : i32
    %c0_i32_0 = arith.constant 0 : i32
    %c0_i32_1 = arith.constant 0 : i32
    return %c0_i32, %c0_i32_0 : i32, i32
  }
  func.func @transform_2(%arg0: i32, %arg1: i32) -> (i32, i32, i32) {
    %c0_i32 = arith.constant 0 : i32
    %c0_i32_0 = arith.constant 0 : i32
    return %arg0, %c0_i32, %arg1 : i32, i32, i32
  }
  func.func @transform_3(%arg0: i32, %arg1: i32) -> (i32, i32, i32) {
    %c1_i32 = arith.constant 1 : i32
    %0 = arith.muli %arg0, %c1_i32 : i32
    %1 = arith.addi %0, %arg1 : i32
    %c0_i32 = arith.constant 0 : i32
    %c0_i32_0 = arith.constant 0 : i32
    %c0_i32_1 = arith.constant 0 : i32
    return %1, %c0_i32, %c0_i32_0 : i32, i32, i32
  }
  func.func @transform_4(%arg0: i32, %arg1: i32) -> (i32, i32, i32) {
    %c1_i32 = arith.constant 1 : i32
    %0 = arith.muli %arg0, %c1_i32 : i32
    %1 = arith.addi %0, %arg1 : i32
    %c0_i32 = arith.constant 0 : i32
    %c0_i32_0 = arith.constant 0 : i32
    %c0_i32_1 = arith.constant 0 : i32
    return %1, %c0_i32, %c0_i32_0 : i32, i32, i32
  }
}

module attributes {stable_mosaic.version = 11 : i64} {
  func.func @_bn_relu_kernel(%arg0: i32, %arg1: i32, %arg2: memref<1x8x128xbf16, #tpu.memory_space<vmem>>, %arg3: memref<8x1xf32, #tpu.memory_space<vmem>>, %arg4: memref<8x1xf32, #tpu.memory_space<vmem>>, %arg5: memref<1x8x128xbf16, #tpu.memory_space<vmem>>) attributes {dimension_semantics = [#tpu.dimension_semantics<parallel>, #tpu.dimension_semantics<parallel>], iteration_bounds = array<i64: 2, 1>, scalar_prefetch = 0 : i64, scratch_operands = 0 : i64, tpu.core_type = #tpu.core_type<tc>, window_params = [{transform_indices = @transform_0, window_bounds = array<i64: 1, 8, 128>}, {pipeline_mode = #tpu.pipeline_mode<synchronous>, transform_indices = @transform_1, window_bounds = array<i64: 8, 1>}, {pipeline_mode = #tpu.pipeline_mode<synchronous>, transform_indices = @transform_2, window_bounds = array<i64: 8, 1>}, {transform_indices = @transform_3, window_bounds = array<i64: 1, 8, 128>}]} {
    %c0 = arith.constant 0 : index
    %c0_0 = arith.constant 0 : index
    %c0_1 = arith.constant 0 : index
    %0 = vector.load %arg2[%c0, %c0_0, %c0_1] : memref<1x8x128xbf16, #tpu.memory_space<vmem>>, vector<1x8x128xbf16>
    %1 = vector.shape_cast %0 : vector<1x8x128xbf16> to vector<8x128xbf16>
    %2 = arith.extf %1 : vector<8x128xbf16> to vector<8x128xf32>
    %c0_2 = arith.constant 0 : index
    %c0_3 = arith.constant 0 : index
    %3 = vector.load %arg3[%c0_2, %c0_3] : memref<8x1xf32, #tpu.memory_space<vmem>>, vector<8x1xf32>
    %4 = vector.broadcast %3 : vector<8x1xf32> to vector<8x128xf32>
    %5 = arith.mulf %2, %4 : vector<8x128xf32>
    %c0_4 = arith.constant 0 : index
    %c0_5 = arith.constant 0 : index
    %6 = vector.load %arg4[%c0_4, %c0_5] : memref<8x1xf32, #tpu.memory_space<vmem>>, vector<8x1xf32>
    %7 = vector.broadcast %6 : vector<8x1xf32> to vector<8x128xf32>
    %8 = arith.addf %5, %7 : vector<8x128xf32>
    %cst = arith.constant 0.000000e+00 : f32
    %9 = vector.broadcast %cst : f32 to vector<8x128xf32>
    %10 = arith.maximumf %8, %9 : vector<8x128xf32>
    %11 = arith.truncf %10 : vector<8x128xf32> to vector<8x128xbf16>
    %c0_6 = arith.constant 0 : index
    %c0_7 = arith.constant 0 : index
    %c0_8 = arith.constant 0 : index
    %12 = vector.load %arg5[%c0_6, %c0_7, %c0_8] : memref<1x8x128xbf16, #tpu.memory_space<vmem>>, vector<1x8x128xbf16>
    %13 = vector.shape_cast %12 : vector<1x8x128xbf16> to vector<8x128xbf16>
    %14 = vector.shape_cast %11 : vector<8x128xbf16> to vector<1x8x128xbf16>
    tpu.vector_store %arg5[%c0_6, %c0_7, %c0_8], %14 {strides = array<i32>} : memref<1x8x128xbf16, #tpu.memory_space<vmem>>, vector<1x8x128xbf16>,
    return
  }
  func.func @transform_0(%arg0: i32, %arg1: i32) -> (i32, i32, i32) {
    %c0_i32 = arith.constant 0 : i32
    %c0_i32_0 = arith.constant 0 : i32
    return %arg0, %c0_i32, %arg1 : i32, i32, i32
  }
  func.func @transform_1(%arg0: i32, %arg1: i32) -> (i32, i32) {
    %c0_i32 = arith.constant 0 : i32
    %c0_i32_0 = arith.constant 0 : i32
    %c0_i32_1 = arith.constant 0 : i32
    return %c0_i32, %c0_i32_0 : i32, i32
  }
  func.func @transform_2(%arg0: i32, %arg1: i32) -> (i32, i32) {
    %c0_i32 = arith.constant 0 : i32
    %c0_i32_0 = arith.constant 0 : i32
    %c0_i32_1 = arith.constant 0 : i32
    return %c0_i32, %c0_i32_0 : i32, i32
  }
  func.func @transform_3(%arg0: i32, %arg1: i32) -> (i32, i32, i32) {
    %c0_i32 = arith.constant 0 : i32
    %c0_i32_0 = arith.constant 0 : i32
    return %arg0, %c0_i32, %arg1 : i32, i32, i32
  }
}

</mosaic_0001>

<llo_original>
// kernel: conv_block_forward.3
$region0: #{conv_block_forward.3}
  #allocation0 [shape = 'u32[]', space=smem, size = 0x4, offset = 0x4, fixed_abs, tag = 'smem constant byte address 0x4 - core index']
  #allocation1 [shape = 'u32[144,128]{1,0:T(1,128)}', space=vmem, size = 0x12000, scoped, tag = 'internal scratch']
  %s0 = inlined_call_operand.vmem [shape: bf16[2,8,128], index: 0, kind: input, shape index: {}]
  %s1 = inlined_call_operand.vmem [shape: f32[8,1], index: 1, kind: input, shape index: {}]
  %s2 = inlined_call_operand.vmem [shape: f32[8,1], index: 2, kind: input, shape index: {}]
  %s3 = inlined_call_operand.vmem [shape: bf16[2,8,128], index: 3, kind: output, shape index: {}]
  %s4 = sld [smem:[#allocation0]]
  $region45: #{conv_block_forward.3} parent=0
    _
  %s6 = ssub.s32 1, %s4
  %s7 = scalar_select 0, %s6, %s4
  loop: start=0, step=1, limit=4
  $region2: #{conv_block_forward.3} parent=0 // loop_pre_header
    _
  $region3: #{conv_block_forward.3} parent=0 // loop_header
    %s9 = sphi 0, %s13
    %p10 = scmp.ge.s32.totalorder %s9, 4
    %s16 = sphi 0, %s28
    %s17 = sphi 0, %s24
    %s18 = sphi 0, %s16
    %s19 = sphi 0, %s17
    %s20 = sphi 0, %s18
    %s21 = sphi 0, %s19
    %s33 = sphi 0, %s35
    %s36 = sphi 0, %s33
    %s37 = sphi 0, %s36
    %s53 = sphi 0, %s37
    %s57 = sphi 0, %s57
    %s59 = sphi 0, %s57
    %s60 = sphi 0, %s59
    %s74 = sphi 0, %s60
    %s78 = sphi 0, %s78
    %s80 = sphi 0, %s78
    %s81 = sphi 0, %s80
    %s95 = sphi 0, %s81
    %s103 = sphi 0, %s105
    %s106 = sphi 0, %s103
    %s107 = sphi 0, %s106
    %s123 = sphi 0, %s107
  $region4: #{conv_block_forward.3} parent=0 // loop_header_branch
    %12 = sbr.rel (%p10) target = $region8
  $region5: #{conv_block_forward.3} parent=0 // loop_body
    %s14 = ssub.s32 %s9, 1
    %s15 = ssub.s32 %s9, 2
    %s22 = sadd.s32 1, %s17
    %p23 = scmp.ge.s32.totalorder %s22, 1
    %s24 = scalar_select %p23, 0, %s22
    %s25 = sadd.s32 1, %s16
    %s26 = scalar_select %p23, %s25, %s16
    %p27 = scmp.ge.s32.totalorder %s26, 2
    %s28 = scalar_select %p27, 0, %s26
    %s29 = ssub.s32 %s16, %s28
    %s30 = ssub.s32 %s17, %s24
    %s31 = sor.u32 %s29, %s30
    %p32 = scmp.eq.s32.totalorder %s31, 0
    %s34 = sadd.s32 %s33, 1
    %s35 = scalar_select %p32, %s33, %s34
    %p38 = pneg %p32
    %p39 = scmp.eq.s32.totalorder %s9, 1
    %p40 = por %p38, %p39
    %p41 = scmp.ne.s32.totalorder %s33, %s36
    %p42 = scmp.eq.s32.totalorder %s9, 0
    %p43 = por %p41, %p42
    %p44 = scmp.ne.s32.totalorder %s33, %s36
    %p45 = scmp.eq.s32.totalorder %s14, 1
    %p46 = por %p44, %p45
    %p47 = scmp.ne.s32.totalorder %s36, %s37
    %p48 = scmp.eq.s32.totalorder %s14, 0
    %p49 = por %p47, %p48
    %p50 = scmp.ne.s32.totalorder %s36, %s37
    %p51 = scmp.eq.s32.totalorder %s15, 1
    %p52 = por %p50, %p51
    %p54 = scmp.ne.s32.totalorder %s37, %s53
    %p55 = scmp.eq.s32.totalorder %s15, 0
    %p56 = por %p54, %p55
    %s58 = sadd.s32 %s57, 1
    %p61 = scmp.eq.s32.totalorder %s9, 1
    %p62 = scmp.ne.s32.totalorder %s57, %s59
    %p63 = scmp.eq.s32.totalorder %s9, 0
    %p64 = por %p62, %p63
    %p65 = scmp.ne.s32.totalorder %s57, %s59
    %p66 = scmp.eq.s32.totalorder %s14, 1
    %p67 = por %p65, %p66
    %p68 = scmp.ne.s32.totalorder %s59, %s60
    %p69 = scmp.eq.s32.totalorder %s14, 0
    %p70 = por %p68, %p69
    %p71 = scmp.ne.s32.totalorder %s59, %s60
    %p72 = scmp.eq.s32.totalorder %s15, 1
    %p73 = por %p71, %p72
    %p75 = scmp.ne.s32.totalorder %s60, %s74
    %p76 = scmp.eq.s32.totalorder %s15, 0
    %p77 = por %p75, %p76
    %s79 = sadd.s32 %s78, 1
    %p82 = scmp.eq.s32.totalorder %s9, 1
    %p83 = scmp.ne.s32.totalorder %s78, %s80
    %p84 = scmp.eq.s32.totalorder %s9, 0
    %p85 = por %p83, %p84
    %p86 = scmp.ne.s32.totalorder %s78, %s80
    %p87 = scmp.eq.s32.totalorder %s14, 1
    %p88 = por %p86, %p87
    %p89 = scmp.ne.s32.totalorder %s80, %s81
    %p90 = scmp.eq.s32.totalorder %s14, 0
    %p91 = por %p89, %p90
    %p92 = scmp.ne.s32.totalorder %s80, %s81
    %p93 = scmp.eq.s32.totalorder %s15, 1
    %p94 = por %p92, %p93
    %p96 = scmp.ne.s32.totalorder %s81, %s95
    %p97 = scmp.eq.s32.totalorder %s15, 0
    %p98 = por %p96, %p97
    %s99 = ssub.s32 %s16, %s28
    %s100 = ssub.s32 %s17, %s24
    %s101 = sor.u32 %s99, %s100
    %p102 = scmp.eq.s32.totalorder %s101, 0
    %s104 = sadd.s32 %s103, 1
    %s105 = scalar_select %p102, %s103, %s104
    %p108 = pneg %p102
    %p109 = scmp.eq.s32.totalorder %s9, 1
    %p110 = por %p108, %p109
    %p111 = scmp.ne.s32.totalorder %s103, %s106
    %p112 = scmp.eq.s32.totalorder %s9, 0
    %p113 = por %p111, %p112
    %p114 = scmp.ne.s32.totalorder %s103, %s106
    %p115 = scmp.eq.s32.totalorder %s14, 1
    %p116 = por %p114, %p115
    %p117 = scmp.ne.s32.totalorder %s106, %s107
    %p118 = scmp.eq.s32.totalorder %s14, 0
    %p119 = por %p117, %p118
    %p120 = scmp.ne.s32.totalorder %s106, %s107
    %p121 = scmp.eq.s32.totalorder %s15, 1
    %p122 = por %p120, %p121
    %p124 = scmp.ne.s32.totalorder %s107, %s123
    %p125 = scmp.eq.s32.totalorder %s15, 0
    %p126 = por %p124, %p125
    %p127 = scmp.le.s32.totalorder 1, %s9
    %p128 = scmp.lt.s32.totalorder %s9, 3
    %p129 = pnand %p127, %p128
    %p130 = pneg %p129
    // Predicated region
    $region9: #{conv_block_forward.3} parent=5 // pred_check
      _
    $region10: #{conv_block_forward.3} parent=5 // pred_check_branch
      %132 = sbr.rel (%p129) target = $region12
    $region11: #{conv_block_forward.3} parent=5 // pred_region
      %s133 = ssub.s32 %s9, 1
      // Predicated region
      $region13: #{conv_block_forward.3} parent=11 // pred_check
        %p134 = pneg %p70
      $region14: #{conv_block_forward.3} parent=11 // pred_check_branch
        %136 = sbr.rel (%p134) target = $region16
      $region15: #{conv_block_forward.3} parent=11 // pred_region
        _
      $region16: #{conv_block_forward.3} parent=11 // pred_fallthru
        _
      // Predicated region
      $region17: #{conv_block_forward.3} parent=11 // pred_check
        %p137 = pneg %p91
      $region18: #{conv_block_forward.3} parent=11 // pred_check_branch
        %139 = sbr.rel (%p137) target = $region20
      $region19: #{conv_block_forward.3} parent=11 // pred_region
        _
      $region20: #{conv_block_forward.3} parent=11 // pred_fallthru
        _
    $region12: #{conv_block_forward.3} parent=5 // pred_fallthru
      _
    %p140 = scmp.lt.s32.totalorder %s9, 2
    // Predicated region
    $region21: #{conv_block_forward.3} parent=5 // pred_check
      %p141 = pneg %p140
    $region22: #{conv_block_forward.3} parent=5 // pred_check_branch
      %143 = sbr.rel (%p141) target = $region24
    $region23: #{conv_block_forward.3} parent=5 // pred_region
      // Predicated region
      $region25: #{conv_block_forward.3} parent=23 // pred_check
        %p144 = pneg %p43
      $region26: #{conv_block_forward.3} parent=23 // pred_check_branch
        %146 = sbr.rel (%p144) target = $region28
      $region27: #{conv_block_forward.3} parent=23 // pred_region
        %p147 = scmp.lt.s32.totalorder %s16, 1
        %s148 = scalar_select %p147, %s16, 1
        %p149 = scmp.lt.s32.totalorder %s17, 0
        %s150 = scalar_select %p149, %s17, 0
        %s151 = sadd.s32 %s150, %s148
        %s152 = smul.addr %s151, 4
        %s153 = scalar_lea.vmem %s0, %s152
      $region28: #{conv_block_forward.3} parent=23 // pred_fallthru
        _
    $region24: #{conv_block_forward.3} parent=5 // pred_fallthru
      _
    %p154 = scmp.le.s32.totalorder 1, %s9
    %p155 = scmp.lt.s32.totalorder %s9, 3
    %p156 = pnand %p154, %p155
    %p157 = pneg %p156
    // Predicated region
    $region29: #{conv_block_forward.3} parent=5 // pred_check
      _
    $region30: #{conv_block_forward.3} parent=5 // pred_check_branch
      %159 = sbr.rel (%p156) target = $region32
    $region31: #{conv_block_forward.3} parent=5 // pred_region
      %s160 = ssub.s32 %s9, 1
      %p161 = scmp.lt.s32.totalorder %s18, 1
      %s162 = scalar_select %p161, %s18, 1
      %p163 = scmp.lt.s32.totalorder %s19, 0
      %s164 = scalar_select %p163, %s19, 0
      %s165 = sadd.s32 %s164, %s162
      %s166 = smul.addr %s165, 4
      %s167 = scalar_lea.vmem %s0, %s166
      %p168 = pneg %p49
      %p169 = pneg %p46
      %p170 = pneg %p70
      %p171 = pneg %p67
      %p172 = pneg %p91
      %p173 = pneg %p88
      %p174 = pneg %p119
      %p175 = pneg %p116
      %p176 = scmp.lt.s32.totalorder %s18, 1
      %s177 = scalar_select %p176, %s18, 1
      %p178 = scmp.lt.s32.totalorder %s19, 0
      %s179 = scalar_select %p178, %s19, 0
      %s180 = sadd.s32 %s179, %s177
      %s181 = smul.addr %s180, 4
      %s182 = scalar_lea.vmem %s3, %s181
      %p183 = scmp.lt.s32.totalorder %s18, 1
      %s184 = scalar_select %p183, %s18, 1
      %p185 = scmp.lt.s32.totalorder %s19, 0
      %s186 = scalar_select %p185, %s19, 0
      %s187 = sadd.s32 %s186, %s184
      %s188 = smul.addr %s187, 4
      %s189 = scalar_lea.vmem %s0, %s188
      %p190 = scmp.lt.s32.totalorder %s18, 1
      %s191 = scalar_select %p190, %s18, 1
      %p192 = scmp.lt.s32.totalorder %s19, 0
      %s193 = scalar_select %p192, %s19, 0
      %s194 = sadd.s32 %s193, %s191
      %s195 = smul.addr %s194, 4
      %s196 = scalar_lea.vmem %s3, %s195
      %v197 = vld [vmem:[%s189] sm:$0xf]
      %v198 = vunpack.c.l.bf16 %v197
      %v199 = vld [vmem:[%s1] sm:$0xff]
      %201 = vset.pattern.permute.xlu0 0
      %202 = vperm.xlu0 %201, %v199
      %v203 = vpop.permute.xlu0 %202
      %v205 = vmul.f32 %v198, %v203
      %v206 = vld [vmem:[%s2] sm:$0xff]
      %208 = vset.pattern.permute.xlu0 0
      %209 = vperm.xlu0 %208, %v206
      %v210 = vpop.permute.xlu0 %209
      %v212 = vadd.f32 %v205, %v210
      %v213 = vmax.f32 %v212, 0.0
      %v214 = vpack.c.bf16 %v213, %v213
      %215 = vst [vmem:[%s196] sm:$0xf] %v214
      %p216 = scmp.lt.s32.totalorder %s18, 1
      %s217 = scalar_select %p216, %s18, 1
      %p218 = scmp.lt.s32.totalorder %s19, 0
      %s219 = scalar_select %p218, %s19, 0
      %s220 = sadd.s32 %s219, %s217
      %s221 = smul.addr %s220, 4
      %s222 = scalar_lea.vmem %s3, %s221
      // Predicated region
      $region33: #{conv_block_forward.3} parent=31 // pred_check
        %p223 = pneg %p116
      $region34: #{conv_block_forward.3} parent=31 // pred_check_branch
        %225 = sbr.rel (%p223) target = $region36
      $region35: #{conv_block_forward.3} parent=31 // pred_region
        _
      $region36: #{conv_block_forward.3} parent=31 // pred_fallthru
        _
    $region32: #{conv_block_forward.3} parent=5 // pred_fallthru
      _
    %p226 = scmp.le.s32.totalorder 2, %s9
    // Predicated region
    $region37: #{conv_block_forward.3} parent=5 // pred_check
      %p227 = pneg %p226
    $region38: #{conv_block_forward.3} parent=5 // pred_check_branch
      %229 = sbr.rel (%p227) target = $region40
    $region39: #{conv_block_forward.3} parent=5 // pred_region
      %s230 = ssub.s32 %s9, 2
      // Predicated region
      $region41: #{conv_block_forward.3} parent=39 // pred_check
        %p231 = pneg %p122
      $region42: #{conv_block_forward.3} parent=39 // pred_check_branch
        %233 = sbr.rel (%p231) target = $region44
      $region43: #{conv_block_forward.3} parent=39 // pred_region
        %p234 = scmp.lt.s32.totalorder %s20, 1
        %s235 = scalar_select %p234, %s20, 1
        %p236 = scmp.lt.s32.totalorder %s21, 0
        %s237 = scalar_select %p236, %s21, 0
        %s238 = sadd.s32 %s237, %s235
        %s239 = smul.addr %s238, 4
        %s240 = scalar_lea.vmem %s3, %s239
      $region44: #{conv_block_forward.3} parent=39 // pred_fallthru
        _
    $region40: #{conv_block_forward.3} parent=5 // pred_fallthru
      _
  $region6: #{conv_block_forward.3} parent=0 // loop_footer
    %s13 = sadd.s32 1, %s9
  $region7: #{conv_block_forward.3} parent=0 // loop_footer_branch
    %8 = sbr.rel target = $region3
  $region8: #{conv_block_forward.3} parent=0 // loop_exit
    _

// kernel: conv_block_forward.2
$region0: #{conv_block_forward.2}
  #allocation0 [shape = 'u32[]', space=smem, size = 0x4, offset = 0x4, fixed_abs, tag = 'smem constant byte address 0x4 - core index']
  #allocation1 [shape = 'u32[144,128]{1,0:T(1,128)}', space=vmem, size = 0x12000, scoped, tag = 'internal scratch']
  %s0 = inlined_call_operand.vmem [shape: bf16[2,36,128], index: 0, kind: input, shape index: {}]
  %s1 = inlined_call_operand.vmem [shape: bf16[8,36], index: 1, kind: input, shape index: {}]
  %s2 = inlined_call_operand.vmem [shape: bf16[2,8,128], index: 2, kind: output, shape index: {0}]
  %s3 = inlined_call_operand.vmem [shape: f32[2,8,1], index: 3, kind: output, shape index: {1}]
  %s4 = inlined_call_operand.vmem [shape: f32[2,8,1], index: 4, kind: output, shape index: {2}]
  %5 = xla_tuple %s2, %s3, %s4
  %s6 = sld [smem:[#allocation0]]
  $region57: #{conv_block_forward.2} parent=0
    _
  %s8 = ssub.s32 1, %s6
  %s9 = scalar_select 0, %s8, %s6
  loop: start=0, step=1, limit=4
  $region2: #{conv_block_forward.2} parent=0 // loop_pre_header
    _
  $region3: #{conv_block_forward.2} parent=0 // loop_header
    %s11 = sphi 0, %s15
    %p12 = scmp.ge.s32.totalorder %s11, 4
    %s18 = sphi 0, %s30
    %s19 = sphi 0, %s26
    %s20 = sphi 0, %s18
    %s21 = sphi 0, %s19
    %s22 = sphi 0, %s20
    %s23 = sphi 0, %s21
    %s35 = sphi 0, %s37
    %s38 = sphi 0, %s35
    %s39 = sphi 0, %s38
    %s55 = sphi 0, %s39
    %s59 = sphi 0, %s59
    %s61 = sphi 0, %s59
    %s62 = sphi 0, %s61
    %s76 = sphi 0, %s62
    %s84 = sphi 0, %s86
    %s87 = sphi 0, %s84
    %s88 = sphi 0, %s87
    %s104 = sphi 0, %s88
    %s112 = sphi 0, %s114
    %s115 = sphi 0, %s112
    %s116 = sphi 0, %s115
    %s132 = sphi 0, %s116
    %s140 = sphi 0, %s142
    %s143 = sphi 0, %s140
    %s144 = sphi 0, %s143
    %s160 = sphi 0, %s144
  $region4: #{conv_block_forward.2} parent=0 // loop_header_branch
    %14 = sbr.rel (%p12) target = $region8
  $region5: #{conv_block_forward.2} parent=0 // loop_body
    %s16 = ssub.s32 %s11, 1
    %s17 = ssub.s32 %s11, 2
    %s24 = sadd.s32 1, %s19
    %p25 = scmp.ge.s32.totalorder %s24, 1
    %s26 = scalar_select %p25, 0, %s24
    %s27 = sadd.s32 1, %s18
    %s28 = scalar_select %p25, %s27, %s18
    %p29 = scmp.ge.s32.totalorder %s28, 2
    %s30 = scalar_select %p29, 0, %s28
    %s31 = ssub.s32 %s18, %s30
    %s32 = ssub.s32 %s19, %s26
    %s33 = sor.u32 %s31, %s32
    %p34 = scmp.eq.s32.totalorder %s33, 0
    %s36 = sadd.s32 %s35, 1
    %s37 = scalar_select %p34, %s35, %s36
    %p40 = pneg %p34
    %p41 = scmp.eq.s32.totalorder %s11, 1
    %p42 = por %p40, %p41
    %p43 = scmp.ne.s32.totalorder %s35, %s38
    %p44 = scmp.eq.s32.totalorder %s11, 0
    %p45 = por %p43, %p44
    %p46 = scmp.ne.s32.totalorder %s35, %s38
    %p47 = scmp.eq.s32.totalorder %s16, 1
    %p48 = por %p46, %p47
    %p49 = scmp.ne.s32.totalorder %s38, %s39
    %p50 = scmp.eq.s32.totalorder %s16, 0
    %p51 = por %p49, %p50
    %p52 = scmp.ne.s32.totalorder %s38, %s39
    %p53 = scmp.eq.s32.totalorder %s17, 1
    %p54 = por %p52, %p53
    %p56 = scmp.ne.s32.totalorder %s39, %s55
    %p57 = scmp.eq.s32.totalorder %s17, 0
    %p58 = por %p56, %p57
    %s60 = sadd.s32 %s59, 1
    %p63 = scmp.eq.s32.totalorder %s11, 1
    %p64 = scmp.ne.s32.totalorder %s59, %s61
    %p65 = scmp.eq.s32.totalorder %s11, 0
    %p66 = por %p64, %p65
    %p67 = scmp.ne.s32.totalorder %s59, %s61
    %p68 = scmp.eq.s32.totalorder %s16, 1
    %p69 = por %p67, %p68
    %p70 = scmp.ne.s32.totalorder %s61, %s62
    %p71 = scmp.eq.s32.totalorder %s16, 0
    %p72 = por %p70, %p71
    %p73 = scmp.ne.s32.totalorder %s61, %s62
    %p74 = scmp.eq.s32.totalorder %s17, 1
    %p75 = por %p73, %p74
    %p77 = scmp.ne.s32.totalorder %s62, %s76
    %p78 = scmp.eq.s32.totalorder %s17, 0
    %p79 = por %p77, %p78
    %s80 = ssub.s32 %s18, %s30
    %s81 = ssub.s32 %s19, %s26
    %s82 = sor.u32 %s80, %s81
    %p83 = scmp.eq.s32.totalorder %s82, 0
    %s85 = sadd.s32 %s84, 1
    %s86 = scalar_select %p83, %s84, %s85
    %p89 = pneg %p83
    %p90 = scmp.eq.s32.totalorder %s11, 1
    %p91 = por %p89, %p90
    %p92 = scmp.ne.s32.totalorder %s84, %s87
    %p93 = scmp.eq.s32.totalorder %s11, 0
    %p94 = por %p92, %p93
    %p95 = scmp.ne.s32.totalorder %s84, %s87
    %p96 = scmp.eq.s32.totalorder %s16, 1
    %p97 = por %p95, %p96
    %p98 = scmp.ne.s32.totalorder %s87, %s88
    %p99 = scmp.eq.s32.totalorder %s16, 0
    %p100 = por %p98, %p99
    %p101 = scmp.ne.s32.totalorder %s87, %s88
    %p102 = scmp.eq.s32.totalorder %s17, 1
    %p103 = por %p101, %p102
    %p105 = scmp.ne.s32.totalorder %s88, %s104
    %p106 = scmp.eq.s32.totalorder %s17, 0
    %p107 = por %p105, %p106
    %s108 = sadd.s32 %s18, %s19
    %s109 = sadd.s32 %s30, %s26
    %s110 = ssub.s32 %s108, %s109
    %p111 = scmp.eq.s32.totalorder %s110, 0
    %s113 = sadd.s32 %s112, 1
    %s114 = scalar_select %p111, %s112, %s113
    %p117 = pneg %p111
    %p118 = scmp.eq.s32.totalorder %s11, 1
    %p119 = por %p117, %p118
    %p120 = scmp.ne.s32.totalorder %s112, %s115
    %p121 = scmp.eq.s32.totalorder %s11, 0
    %p122 = por %p120, %p121
    %p123 = scmp.ne.s32.totalorder %s112, %s115
    %p124 = scmp.eq.s32.totalorder %s16, 1
    %p125 = por %p123, %p124
    %p126 = scmp.ne.s32.totalorder %s115, %s116
    %p127 = scmp.eq.s32.totalorder %s16, 0
    %p128 = por %p126, %p127
    %p129 = scmp.ne.s32.totalorder %s115, %s116
    %p130 = scmp.eq.s32.totalorder %s17, 1
    %p131 = por %p129, %p130
    %p133 = scmp.ne.s32.totalorder %s116, %s132
    %p134 = scmp.eq.s32.totalorder %s17, 0
    %p135 = por %p133, %p134
    %s136 = sadd.s32 %s18, %s19
    %s137 = sadd.s32 %s30, %s26
    %s138 = ssub.s32 %s136, %s137
    %p139 = scmp.eq.s32.totalorder %s138, 0
    %s141 = sadd.s32 %s140, 1
    %s142 = scalar_select %p139, %s140, %s141
    %p145 = pneg %p139
    %p146 = scmp.eq.s32.totalorder %s11, 1
    %p147 = por %p145, %p146
    %p148 = scmp.ne.s32.totalorder %s140, %s143
    %p149 = scmp.eq.s32.totalorder %s11, 0
    %p150 = por %p148, %p149
    %p151 = scmp.ne.s32.totalorder %s140, %s143
    %p152 = scmp.eq.s32.totalorder %s16, 1
    %p153 = por %p151, %p152
    %p154 = scmp.ne.s32.totalorder %s143, %s144
    %p155 = scmp.eq.s32.totalorder %s16, 0
    %p156 = por %p154, %p155
    %p157 = scmp.ne.s32.totalorder %s143, %s144
    %p158 = scmp.eq.s32.totalorder %s17, 1
    %p159 = por %p157, %p158
    %p161 = scmp.ne.s32.totalorder %s144, %s160
    %p162 = scmp.eq.s32.totalorder %s17, 0
    %p163 = por %p161, %p162
    %p164 = scmp.le.s32.totalorder 1, %s11
    %p165 = scmp.lt.s32.totalorder %s11, 3
    %p166 = pnand %p164, %p165
    %p167 = pneg %p166
    // Predicated region
    $region9: #{conv_block_forward.2} parent=5 // pred_check
      _
    $region10: #{conv_block_forward.2} parent=5 // pred_check_branch
      %169 = sbr.rel (%p166) target = $region12
    $region11: #{conv_block_forward.2} parent=5 // pred_region
      %s170 = ssub.s32 %s11, 1
      // Predicated region
      $region13: #{conv_block_forward.2} parent=11 // pred_check
        %p171 = pneg %p72
      $region14: #{conv_block_forward.2} parent=11 // pred_check_branch
        %173 = sbr.rel (%p171) target = $region16
      $region15: #{conv_block_forward.2} parent=11 // pred_region
        _
      $region16: #{conv_block_forward.2} parent=11 // pred_fallthru
        _
    $region12: #{conv_block_forward.2} parent=5 // pred_fallthru
      _
    %p174 = scmp.lt.s32.totalorder %s11, 2
    // Predicated region
    $region17: #{conv_block_forward.2} parent=5 // pred_check
      %p175 = pneg %p174
    $region18: #{conv_block_forward.2} parent=5 // pred_check_branch
      %177 = sbr.rel (%p175) target = $region20
    $region19: #{conv_block_forward.2} parent=5 // pred_region
      // Predicated region
      $region21: #{conv_block_forward.2} parent=19 // pred_check
        %p178 = pneg %p45
      $region22: #{conv_block_forward.2} parent=19 // pred_check_branch
        %180 = sbr.rel (%p178) target = $region24
      $region23: #{conv_block_forward.2} parent=19 // pred_region
        %p181 = scmp.lt.s32.totalorder %s18, 1
        %s182 = scalar_select %p181, %s18, 1
        %p183 = scmp.lt.s32.totalorder %s19, 0
        %s184 = scalar_select %p183, %s19, 0
        %s185 = smul.addr %s182, 5
        %s186 = sadd.s32 %s184, %s185
        %s187 = smul.addr %s186, 4
        %s188 = scalar_lea.vmem %s0, %s187
      $region24: #{conv_block_forward.2} parent=19 // pred_fallthru
        _
    $region20: #{conv_block_forward.2} parent=5 // pred_fallthru
      _
    %p189 = scmp.le.s32.totalorder 1, %s11
    %p190 = scmp.lt.s32.totalorder %s11, 3
    %p191 = pnand %p189, %p190
    %p192 = pneg %p191
    // Predicated region
    $region25: #{conv_block_forward.2} parent=5 // pred_check
      _
    $region26: #{conv_block_forward.2} parent=5 // pred_check_branch
      %194 = sbr.rel (%p191) target = $region28
    $region27: #{conv_block_forward.2} parent=5 // pred_region
      %s195 = ssub.s32 %s11, 1
      %p196 = scmp.lt.s32.totalorder %s20, 1
      %s197 = scalar_select %p196, %s20, 1
      %p198 = scmp.lt.s32.totalorder %s21, 0
      %s199 = scalar_select %p198, %s21, 0
      %s200 = smul.addr %s197, 5
      %s201 = sadd.s32 %s199, %s200
      %s202 = smul.addr %s201, 4
      %s203 = scalar_lea.vmem %s0, %s202
      %p204 = pneg %p51
      %p205 = pneg %p48
      %p206 = pneg %p72
      %p207 = pneg %p69
      %p208 = pneg %p100
      %p209 = pneg %p97
      %p210 = scmp.lt.s32.totalorder %s20, 1
      %s211 = scalar_select %p210, %s20, 1
      %p212 = scmp.lt.s32.totalorder %s21, 0
      %s213 = scalar_select %p212, %s21, 0
      %s214 = sadd.s32 %s213, %s211
      %s215 = smul.addr %s214, 4
      %s216 = scalar_lea.vmem %s2, %s215
      %p217 = pneg %p128
      %p218 = pneg %p125
      %s219 = sadd.s32 %s20, %s21
      %p220 = scmp.lt.s32.totalorder %s219, 1
      %s221 = scalar_select %p220, %s219, 1
      %s222 = smul.addr %s221, 8
      %s223 = scalar_lea.vmem %s3, %s222
      %p224 = pneg %p156
      %p225 = pneg %p153
      %s226 = sadd.s32 %s20, %s21
      %p227 = scmp.lt.s32.totalorder %s226, 1
      %s228 = scalar_select %p227, %s226, 1
      %s229 = smul.addr %s228, 8
      %s230 = scalar_lea.vmem %s4, %s229
      %p231 = scmp.lt.s32.totalorder %s20, 1
      %s232 = scalar_select %p231, %s20, 1
      %p233 = scmp.lt.s32.totalorder %s21, 0
      %s234 = scalar_select %p233, %s21, 0
      %s235 = smul.addr %s232, 5
      %s236 = sadd.s32 %s234, %s235
      %s237 = smul.addr %s236, 4
      %s238 = scalar_lea.vmem %s0, %s237
      %p239 = scmp.lt.s32.totalorder %s20, 1
      %s240 = scalar_select %p239, %s20, 1
      %p241 = scmp.lt.s32.totalorder %s21, 0
      %s242 = scalar_select %p241, %s21, 0
      %s243 = sadd.s32 %s242, %s240
      %s244 = smul.addr %s243, 4
      %s245 = scalar_lea.vmem %s2, %s244
      %s246 = sadd.s32 %s20, %s21
      %p247 = scmp.lt.s32.totalorder %s246, 1
      %s248 = scalar_select %p247, %s246, 1
      %s249 = smul.addr %s248, 8
      %s250 = scalar_lea.vmem %s3, %s249
      %s251 = sadd.s32 %s20, %s21
      %s252 = sadd.s32 %s20, %s21
      %p253 = scmp.lt.s32.totalorder %s252, 1
      %s254 = scalar_select %p253, %s252, 1
      %s255 = smul.addr %s254, 8
      %s256 = scalar_lea.vmem %s4, %s255
      %s257 = sadd.s32 %s20, %s21
      %v259 = vld [vmem:[%s1] sm:$0xf]
      %v260 = vld [vmem:[%s238] sm:$0xf]
      %v261 = vld [vmem:[%s238 + $0x4] sm:$0xf]
      %v262 = vld [vmem:[%s238 + $0x8] sm:$0xf]
      %v263 = vld [vmem:[%s238 + $0xc] sm:$0xf]
      %v264 = vld [vmem:[%s238 + $0x10] sm:$0x3]
      %v270 = vunpack.c.l.b16 %v260
      %v271 = vunpack.c.l.b16 %v261
      %v272 = vunpack.c.l.b16 %v262
      %v273 = vunpack.c.l.b16 %v263
      %v274 = vunpack.c.l.b16 %v264
      %v275 = vpack.c.b16 %v271, %v270
      %v276 = vpack.c.b16 %v273, %v272
      %v277 = vpack.c.b16 %v274, %v274
      %vm280 = vcmask 293888
      %v282 = vsel %vm280, %v259, 0
      %vm284 = vcmask 1041408
      %v286 = vsel %vm284, %v277, 0
      %288 = vmatprep.subr.bf16.mxu0 0
      %289 = vmatpush1.bf16.msra.mxu0 0
      %290 = vmatprep.subr.bf16.mxu0 0
      %291 = vmatpush1.bf16.msra.mxu0 0
      %292 = vmatprep.subr.bf16.mxu0 0
      %293 = vmatpush1.bf16.msra.mxu0 0
      %294 = vmatprep.subr.bf16.mxu0 0
      %295 = vmatpush1.bf16.msra.mxu0 0
      %296 = vmatprep.subr.bf16.mxu0 0
      %297 = vmatpush1.bf16.msra.mxu0 0
      %298 = vmatprep.subr.bf16.mxu0 0
      %299 = vmatpush1.bf16.msra.mxu0 %v286
      %300 = vmatprep.subr.bf16.mxu0 0
      %301 = vmatpush1.bf16.msra.mxu0 %v276
      %302 = vmatprep.subr.bf16.mxu0 0
      %303 = vmatpush1.bf16.msra.mxu0 %v275
      %304 = vmatprep.subr.bf16.mxu0 0
      %305 = vmatpush2.bf16.msra.mxu0 0
      %306 = vmatprep.subr.bf16.mxu0 0
      %307 = vmatpush2.bf16.msra.mxu0 0
      %308 = vmatprep.subr.bf16.mxu0 0
      %309 = vmatpush2.bf16.msra.mxu0 0
      %310 = vmatprep.subr.bf16.mxu0 0
      %311 = vmatpush2.bf16.msra.mxu0 0
      %312 = vmatprep.subr.bf16.mxu0 0
      %313 = vmatpush2.bf16.msra.mxu0 0
      %314 = vmatprep.subr.bf16.mxu0 0
      %315 = vmatpush2.bf16.msra.mxu0 0
      %316 = vmatprep.subr.bf16.mxu0 0
      %317 = vmatpush2.bf16.msra.mxu0 0
      %318 = vmatprep.subr.bf16.mxu0 0
      %319 = vmatpush2.bf16.msra.mxu0 0
      %320 = vmatprep.mubr.bf16.mxu0 0
      %321 = vmatmul.mubr.bf16.gmra.mxu0 %v282
      %v322 = vpop.f32.mrf.mxu0
      %v323 = vadd.f32 0.0, %v322
      %v324 = vpop.f32.mrf.mxu0
      %v325 = vpop.f32.mrf.mxu0
      %v326 = vpop.f32.mrf.mxu0
      %327 = vdwg.mxu0
      %v328 = vpack.c.bf16 %v323, %v323
      %329 = vst [vmem:[%s245] sm:$0xf] %v328
      %330 = vadd.xlane.f32.xlu0 %v323
      %v331 = vpop.xlane.xlu0 %330
      %vm332 = vcmask 7168
      %333 = vst.msk [vmem:[%s250] sm:$0xff] %vm332, %v331
      %v334 = vmul.f32 %v323, %v323
      %335 = vadd.xlane.f32.xlu0 %v334
      %v336 = vpop.xlane.xlu0 %335
      %337 = vst.msk [vmem:[%s256] sm:$0xff] %vm332, %v336
      %p338 = scmp.lt.s32.totalorder %s20, 1
      %s339 = scalar_select %p338, %s20, 1
      %p340 = scmp.lt.s32.totalorder %s21, 0
      %s341 = scalar_select %p340, %s21, 0
      %s342 = sadd.s32 %s341, %s339
      %s343 = smul.addr %s342, 4
      %s344 = scalar_lea.vmem %s2, %s343
      %s345 = sadd.s32 %s20, %s21
      %p346 = scmp.lt.s32.totalorder %s345, 1
      %s347 = scalar_select %p346, %s345, 1
      %s348 = smul.addr %s347, 8
      %s349 = scalar_lea.vmem %s3, %s348
      %s350 = sadd.s32 %s20, %s21
      %p351 = scmp.lt.s32.totalorder %s350, 1
      %s352 = scalar_select %p351, %s350, 1
      %s353 = smul.addr %s352, 8
      %s354 = scalar_lea.vmem %s4, %s353
      // Predicated region
      $region29: #{conv_block_forward.2} parent=27 // pred_check
        %p355 = pneg %p97
      $region30: #{conv_block_forward.2} parent=27 // pred_check_branch
        %357 = sbr.rel (%p355) target = $region32
      $region31: #{conv_block_forward.2} parent=27 // pred_region
        _
      $region32: #{conv_block_forward.2} parent=27 // pred_fallthru
        _
      // Predicated region
      $region33: #{conv_block_forward.2} parent=27 // pred_check
        %p358 = pneg %p125
      $region34: #{conv_block_forward.2} parent=27 // pred_check_branch
        %360 = sbr.rel (%p358) target = $region36
      $region35: #{conv_block_forward.2} parent=27 // pred_region
        %s361 = sadd.s32 %s20, %s21
      $region36: #{conv_block_forward.2} parent=27 // pred_fallthru
        _
      // Predicated region
      $region37: #{conv_block_forward.2} parent=27 // pred_check
        %p362 = pneg %p153
      $region38: #{conv_block_forward.2} parent=27 // pred_check_branch
        %364 = sbr.rel (%p362) target = $region40
      $region39: #{conv_block_forward.2} parent=27 // pred_region
        %s365 = sadd.s32 %s20, %s21
      $region40: #{conv_block_forward.2} parent=27 // pred_fallthru
        _
    $region28: #{conv_block_forward.2} parent=5 // pred_fallthru
      _
    %p366 = scmp.le.s32.totalorder 2, %s11
    // Predicated region
    $region41: #{conv_block_forward.2} parent=5 // pred_check
      %p367 = pneg %p366
    $region42: #{conv_block_forward.2} parent=5 // pred_check_branch
      %369 = sbr.rel (%p367) target = $region44
    $region43: #{conv_block_forward.2} parent=5 // pred_region
      %s370 = ssub.s32 %s11, 2
      // Predicated region
      $region45: #{conv_block_forward.2} parent=43 // pred_check
        %p371 = pneg %p103
      $region46: #{conv_block_forward.2} parent=43 // pred_check_branch
        %373 = sbr.rel (%p371) target = $region48
      $region47: #{conv_block_forward.2} parent=43 // pred_region
        %p374 = scmp.lt.s32.totalorder %s22, 1
        %s375 = scalar_select %p374, %s22, 1
        %p376 = scmp.lt.s32.totalorder %s23, 0
        %s377 = scalar_select %p376, %s23, 0
        %s378 = sadd.s32 %s377, %s375
        %s379 = smul.addr %s378, 4
        %s380 = scalar_lea.vmem %s2, %s379
      $region48: #{conv_block_forward.2} parent=43 // pred_fallthru
        _
      // Predicated region
      $region49: #{conv_block_forward.2} parent=43 // pred_check
        %p381 = pneg %p131
      $region50: #{conv_block_forward.2} parent=43 // pred_check_branch
        %383 = sbr.rel (%p381) target = $region52
      $region51: #{conv_block_forward.2} parent=43 // pred_region
        %s384 = sadd.s32 %s22, %s23
        %p385 = scmp.lt.s32.totalorder %s384, 1
        %s386 = scalar_select %p385, %s384, 1
        %s387 = smul.addr %s386, 8
        %s388 = scalar_lea.vmem %s3, %s387
      $region52: #{conv_block_forward.2} parent=43 // pred_fallthru
        _
      // Predicated region
      $region53: #{conv_block_forward.2} parent=43 // pred_check
        %p389 = pneg %p159
      $region54: #{conv_block_forward.2} parent=43 // pred_check_branch
        %391 = sbr.rel (%p389) target = $region56
      $region55: #{conv_block_forward.2} parent=43 // pred_region
        %s392 = sadd.s32 %s22, %s23
        %p393 = scmp.lt.s32.totalorder %s392, 1
        %s394 = scalar_select %p393, %s392, 1
        %s395 = smul.addr %s394, 8
        %s396 = scalar_lea.vmem %s4, %s395
      $region56: #{conv_block_forward.2} parent=43 // pred_fallthru
        _
    $region44: #{conv_block_forward.2} parent=5 // pred_fallthru
      _
  $region6: #{conv_block_forward.2} parent=0 // loop_footer
    %s15 = sadd.s32 1, %s11
  $region7: #{conv_block_forward.2} parent=0 // loop_footer_branch
    %10 = sbr.rel target = $region3
  $region8: #{conv_block_forward.2} parent=0 // loop_exit
    _

</llo_original>
